<compile_context>
chip_gen: v6e
topology: v6e:2x2x1
jax: 0.10.0
libtpu: 0.0.40
codegen_flags: <defaults>
</compile_context>

<pallas_src>
import math

import jax
import jax.numpy as jnp
from jax import lax
from jax.experimental import pallas as pl
from jax.experimental.pallas import tpu as pltpu


# ----------------------------- Pallas kernels ------------------------------

def _pool_time_kernel(x_ref, o_ref):
    """avg_pool2d(x, (2, 1)): average adjacent H rows via sublane-strided loads.

    x_ref: (tb, H, W), o_ref: (tb, H//2, W).  f32 accumulation, stores input dtype.
    """
    hh = o_ref.shape[1]
    even = x_ref[:, pl.ds(0, hh, stride=2), :].astype(jnp.float32)
    odd = x_ref[:, pl.ds(1, hh, stride=2), :].astype(jnp.float32)
    o_ref[...] = ((even + odd) * 0.5).astype(o_ref.dtype)


def _pool_half_kernel(x_ref, o_ref):
    """avg_pool2d(x, 2) on a (batch*H, W) 2-D view.

    H pooled with sublane-strided loads, W pooled with one MXU matmul against an
    in-register (W, W//2) matrix (iota/compare only: no extra operand, no int div).
    x_ref: (tb*H, W), o_ref: (tb*(H//2), W//2).  No in-kernel reshapes.
    """
    rows_out, wh = o_ref.shape
    w = x_ref.shape[1]
    a = (x_ref[pl.ds(0, rows_out, stride=2), :].astype(jnp.float32) +
         x_ref[pl.ds(1, rows_out, stride=2), :].astype(jnp.float32))
    col = lax.broadcasted_iota(jnp.int32, (w, wh), 0)
    oc2 = lax.broadcasted_iota(jnp.int32, (w, wh), 1) * 2
    p = jnp.where((col == oc2) | (col == oc2 + 1),
                  jnp.float32(0.25), jnp.float32(0.0))
    o_ref[...] = jnp.dot(a, p, preferred_element_type=jnp.float32).astype(o_ref.dtype)


def _pool_fused_kernel(x_ref, m_ref, o_ref):
    """Whole 2x2 / 2x1 pool as ONE MXU matmul on a lane-dense (tb, H*W) slab.

    Used for small feature maps where the output width would be far below 128 lanes.
    x_ref: (tb, H*W), m_ref: (H*W, out_HW), o_ref: (tb, out_HW).  f32 accumulation.
    """
    o_ref[...] = jnp.dot(x_ref[...], m_ref[...],
                         preferred_element_type=jnp.float32).astype(o_ref.dtype)


# ----------------------------- host-side helpers ------------------------------

_FUSED_MATRIX_BYTES_CAP = 2 << 20   # only fuse the whole pool while the matrix is small


def _vmem_budgets():
    """(input-block byte budget, vmem_limit_bytes), chosen per TPU generation.

    Total per-step footprint is roughly 4-6x the input-block budget (double-buffered
    input + double-buffered output + f32 temporaries), so the limits leave headroom:
    28 MiB fits v7x's 64 MiB physical VMEM; 40 MiB fits v5e/v6e's 128 MiB physical
    VMEM (their 16/32 MiB scoped defaults are overridden by vmem_limit_bytes).
    """
    budget, limit = 4 << 20, 28 << 20          # safe everywhere (incl. v7x / unknown)
    try:
        vmem = int(getattr(pltpu.get_tpu_info(), "vmem_capacity_bytes", 0) or 0)
        if vmem >= (96 << 20):                 # v5e / v6e: 128 MiB physical VMEM
            budget, limit = 6 << 20, 40 << 20
    except Exception:
        pass
    return budget, limit


def _choose_tb(b, bytes_per_elem, budget_bytes, step=1):
    """Batch elements per block: VMEM-budgeted, >= 2 grid steps when possible (so both
    v7x TensorCores get work), multiple of `step` (sublane-layout constraint for the
    2-D views), with balanced block sizes so the ragged last block stays cheap."""
    tb = max(1, int(budget_bytes) // max(1, int(bytes_per_elem)))
    if b >= 2 * step:
        tb = min(tb, pl.cdiv(b, 2))            # at least 2 grid steps
    tb = min(tb, b)
    if step > 1:
        tb = (tb // step) * step
        if tb < step:
            tb = min(b, step)
        return tb
    nsteps = pl.cdiv(b, tb)
    return max(1, pl.cdiv(b, nsteps))          # equalize block sizes across the grid


def _fused_pool_matrix(h, w, kh, kw, dtype):
    """(H*W, (H//kh)*(W//kw)) matrix with 1/(kh*kw) linking each input element to its
    pooling window (built once on the host; tiny for shapes that take this path)."""
    hh, wh = h // kh, w // kw
    pi = jnp.arange(h * w)
    qi = jnp.arange(hh * wh)
    pr, pc = pi // w, pi % w
    qr, qc = qi // wh, qi % wh
    hit = ((pr[:, None] // kh) == qr[None, :]) & ((pc[:, None] // kw) == qc[None, :])
    return (hit.astype(jnp.float32) * (1.0 / (kh * kw))).astype(dtype)


# ----------------------------- public wrapper ------------------------------

def downsample(x, layer_type):
    """JAX/Pallas equivalent of DownSample(layer_type).forward(x); x is NCHW."""
    if layer_type == 'none':
        return x                                        # pure identity, no kernel needed
    if layer_type not in ('timepreserve', 'half'):
        raise RuntimeError(
            'Got unexpected donwsampletype %s, expected is [none, timepreserve, half]'
            % layer_type)

    kh, kw = (2, 1) if layer_type == 'timepreserve' else (2, 2)
    n, c, h, w = x.shape
    hh, wh = h // kh, w // kw
    b = n * c
    itemsize = x.dtype.itemsize
    budget, vmem_limit = _vmem_budgets()
    cparams = pltpu.CompilerParams(dimension_semantics=("parallel",),
                                   vmem_limit_bytes=vmem_limit)

    # ---- lane-dense fused path for small feature maps (output width << 128) -------
    hw, ohw = h * w, hh * wh
    if wh < 128 and hw * ohw * itemsize <= _FUSED_MATRIX_BYTES_CAP:
        x2 = x.reshape(b, hw)                           # leading-dim merge -> free view
        mat = _fused_pool_matrix(h, w, kh, kw, x.dtype)
        tb = _choose_tb(b, hw * itemsize, budget, step=8)
        grid = (pl.cdiv(b, tb),)
        out = pl.pallas_call(
            _pool_fused_kernel,
            out_shape=jax.ShapeDtypeStruct((b, ohw), x.dtype),
            grid=grid,
            in_specs=[pl.BlockSpec((tb, hw), lambda i: (i, 0)),
                      pl.BlockSpec((hw, ohw), lambda i: (0, 0))],
            out_specs=pl.BlockSpec((tb, ohw), lambda i: (i, 0)),
            compiler_params=cparams,
            cost_estimate=pl.CostEstimate(
                flops=2 * b * hw * ohw, transcendentals=0,
                bytes_accessed=(b * hw + b * ohw) * itemsize
                               + grid[0] * hw * ohw * itemsize),
        )(x2, mat)
        return out.reshape(n, c, hh, wh)

    # ---- general path: timepreserve (H-only pooling, 3-D blocks) -------------------
    if layer_type == 'timepreserve':
        x3 = x.reshape(b, h, w)                         # leading-dim merge -> free view
        tb = _choose_tb(b, h * w * itemsize, budget)
        grid = (pl.cdiv(b, tb),)
        out = pl.pallas_call(
            _pool_time_kernel,
            out_shape=jax.ShapeDtypeStruct((b, hh, w), x.dtype),
            grid=grid,
            in_specs=[pl.BlockSpec((tb, h, w), lambda i: (i, 0, 0))],
            out_specs=pl.BlockSpec((tb, hh, w), lambda i: (i, 0, 0)),
            compiler_params=cparams,
            cost_estimate=pl.CostEstimate(
                flops=2 * b * hh * w, transcendentals=0,
                bytes_accessed=(b * h * w + b * hh * w) * itemsize),
        )(x3)
        return out.reshape(n, c, hh, w)

    # ---- general path: half (H via strided sublanes, W via MXU), 2-D blocks --------
    if h % 2:                                           # avg_pool2d floors: drop odd row
        h = hh * 2
        x = x[:, :, :h, :]
    x2 = x.reshape(b * h, w)                            # leading-dim merge -> free view
    step = 8 // math.gcd(hh, 8)                         # keep tb*H, tb*(H//2) sublane-aligned
    tb = _choose_tb(b, h * w * itemsize, budget, step=step)
    grid = (pl.cdiv(b, tb),)
    out = pl.pallas_call(
        _pool_half_kernel,
        out_shape=jax.ShapeDtypeStruct((b * hh, wh), x.dtype),
        grid=grid,
        in_specs=[pl.BlockSpec((tb * h, w), lambda i: (i, 0))],
        out_specs=pl.BlockSpec((tb * hh, wh), lambda i: (i, 0)),
        compiler_params=cparams,
        cost_estimate=pl.CostEstimate(
            flops=b * hh * w * (1 + 2 * wh), transcendentals=0,
            bytes_accessed=(b * h * w + b * hh * wh) * itemsize),
    )(x2)
    return out.reshape(n, c, hh, wh)


# ----------------------------- demo / self-check ------------------------------

if __name__ == "__main__":
    def ref_pool(xx, kh, kw):
        nn, cc, hh_, ww_ = xx.shape
        ho, wo = hh_ // kh, ww_ // kw
        xr = xx[:, :, :ho * kh, :wo * kw].reshape(nn, cc, ho, kh, wo, kw)
        return xr.mean(axis=(3, 5))

    # Small feature map (W << 128)  -> lane-dense fused-matmul path.
    x_small = jax.random.normal(jax.random.PRNGKey(0), (2, 4, 16, 16), jnp.float32)
    # Wide feature map (W = 128)    -> strided-sublane + MXU column-pool path.
    x_wide = jax.random.normal(jax.random.PRNGKey(1), (2, 4, 16, 128), jnp.float32)

    out_none = jax.block_until_ready(downsample(x_small, 'none'))
    out_time_s = jax.block_until_ready(downsample(x_small, 'timepreserve'))
    out_half_s = jax.block_until_ready(downsample(x_small, 'half'))
    out_time_w = jax.block_until_ready(downsample(x_wide, 'timepreserve'))
    out_half_w = jax.block_until_ready(downsample(x_wide, 'half'))

    assert out_none.shape == (2, 4, 16, 16), out_none.shape
    assert out_time_s.shape == (2, 4, 8, 16), out_time_s.shape
    assert out_half_s.shape == (2, 4, 8, 8), out_half_s.shape
    assert out_time_w.shape == (2, 4, 8, 128), out_time_w.shape
    assert out_half_w.shape == (2, 4, 8, 64), out_half_w.shape
    assert jnp.allclose(out_none, x_small)
    assert jnp.allclose(out_time_s, ref_pool(x_small, 2, 1), atol=1e-5, rtol=1e-5)
    assert jnp.allclose(out_half_s, ref_pool(x_small, 2, 2), atol=1e-5, rtol=1e-5)
    assert jnp.allclose(out_time_w, ref_pool(x_wide, 2, 1), atol=1e-5, rtol=1e-5)
    assert jnp.allclose(out_half_w, ref_pool(x_wide, 2, 2), atol=1e-5, rtol=1e-5)
    print("KERNEL_OK")
</pallas_src>

<mosaic_0001>
module attributes {stable_mosaic.version = 11 : i64} {
  func.func @_pool_fused_kernel(%arg0: i32, %arg1: memref<8x256xf32, #tpu.memory_space<vmem>>, %arg2: memref<256x128xf32, #tpu.memory_space<vmem>>, %arg3: memref<8x128xf32, #tpu.memory_space<vmem>>) attributes {dimension_semantics = [#tpu.dimension_semantics<parallel>], iteration_bounds = array<i64: 1>, scalar_prefetch = 0 : i64, scratch_operands = 0 : i64, tpu.core_type = #tpu.core_type<tc>, window_params = [{transform_indices = @transform_0, window_bounds = array<i64: 8, 256>}, {pipeline_mode = #tpu.pipeline_mode<synchronous>, transform_indices = @transform_1, window_bounds = array<i64: 256, 128>}, {transform_indices = @transform_2, window_bounds = array<i64: 8, 128>}]} {
    %c0 = arith.constant 0 : index
    %c0_0 = arith.constant 0 : index
    %0 = vector.load %arg1[%c0, %c0_0] : memref<8x256xf32, #tpu.memory_space<vmem>>, vector<8x256xf32>
    %c0_1 = arith.constant 0 : index
    %c0_2 = arith.constant 0 : index
    %1 = vector.load %arg2[%c0_1, %c0_2] : memref<256x128xf32, #tpu.memory_space<vmem>>, vector<256x128xf32>
    %cst = arith.constant dense<0.000000e+00> : vector<8x128xf32>
    %2 = tpu.matmul %0, %1, %cst {dimension_numbers = #tpu.dot_dimension_numbers<[1], [0], [0], [1], [0, 0, 1, 1], [], []>} : vector<8x256xf32>, vector<256x128xf32>, vector<8x128xf32> -> vector<8x128xf32>
    %c0_3 = arith.constant 0 : index
    %c0_4 = arith.constant 0 : index
    %3 = vector.load %arg3[%c0_3, %c0_4] : memref<8x128xf32, #tpu.memory_space<vmem>>, vector<8x128xf32>
    tpu.vector_store %arg3[%c0_3, %c0_4], %2 {strides = array<i32>} : memref<8x128xf32, #tpu.memory_space<vmem>>, vector<8x128xf32>,
    return
  }
  func.func @transform_0(%arg0: i32) -> (i32, i32) {
    %c0_i32 = arith.constant 0 : i32
    %c0_i32_0 = arith.constant 0 : i32
    return %arg0, %c0_i32 : i32, i32
  }
  func.func @transform_1(%arg0: i32) -> (i32, i32) {
    %c0_i32 = arith.constant 0 : i32
    %c0_i32_0 = arith.constant 0 : i32
    %c0_i32_1 = arith.constant 0 : i32
    return %c0_i32, %c0_i32_0 : i32, i32
  }
  func.func @transform_2(%arg0: i32) -> (i32, i32) {
    %c0_i32 = arith.constant 0 : i32
    %c0_i32_0 = arith.constant 0 : i32
    return %arg0, %c0_i32 : i32, i32
  }
}

</mosaic_0001>

<llo_original>
// kernel: tpu_custom_call.1
$region0: #{tpu_custom_call.1}
  #allocation0 [shape = 'u32[]', space=smem, size = 0x4, offset = 0x4, fixed_abs, tag = 'smem constant byte address 0x4 - core index']
  #allocation1 [shape = 'u32[144,128]{1,0:T(1,128)}', space=vmem, size = 0x12000, scoped, tag = 'internal scratch']
  %s0 = inlined_call_operand.hbm [shape: f32[8,256], index: 0, kind: input, shape index: {}]
  %s1 = inlined_call_operand.hbm [shape: f32[256,128], index: 1, kind: input, shape index: {}]
  %s2 = inlined_call_operand.hbm [shape: f32[8,128], index: 2, kind: output, shape index: {}]
  %s3 = sld [smem:[#allocation0]]
  $region26: #{tpu_custom_call.1} parent=0
    _
  %s5 = ssub.s32 1, %s3
  %s6 = scalar_select 0, %s5, %s3
  $region1: #{tpu_custom_call.1} parent=0
    #allocation2 [shape = 'u8[8192]{0}', space=vmem, size = 0x2000, scoped, tag = 'input window, operand 0, single buffered']
    #allocation3 [shape = 's32[1]{0}', space=sflag, size = 0x4, scoped, tag = 'scoped memory for tpu_custom_call.1']
    #allocation4 [shape = 's32[1]{0}', space=sflag, size = 0x4, scoped, tag = 'scoped memory for tpu_custom_call.1']
    #allocation5 [shape = 'u8[131072]{0}', space=vmem, size = 0x20000, scoped, tag = 'input window, operand 1, single buffered']
    #allocation6 [shape = 's32[1]{0}', space=sflag, size = 0x4, scoped, tag = 'scoped memory for tpu_custom_call.1']
    #allocation7 [shape = 'u8[4096]{0}', space=vmem, size = 0x1000, scoped, tag = 'output window, operand 0, single buffered']
    %7 = vsyncpa [#allocation3], 0
    %8 = vsyncpa [#allocation6], 0
    %9 = vsyncpa [#allocation4], 0
    // Predicated region
    $region2: #{tpu_custom_call.1} parent=1 // pred_check
      _
    $region3: #{tpu_custom_call.1} parent=1 // pred_check_branch
      %11 = sbr.rel (0) target = $region5
    $region4: #{tpu_custom_call.1} parent=1 // pred_region
      %s13 = ssub.s32 256, 256
      %14 = vsyncadd [#allocation3], %s13
      %s16 = sshll.u32 [#allocation2], 4
      %s17 = int_to_ptr.vmem [resolvable:$true] %s16
      %19 = dma.hbm_to_vmem [thread:$0]  %s0, 256, %s17, [#allocation3]
    $region5: #{tpu_custom_call.1} parent=1 // pred_fallthru
      _
    // Predicated region
    $region6: #{tpu_custom_call.1} parent=1 // pred_check
      _
    $region7: #{tpu_custom_call.1} parent=1 // pred_check_branch
      %21 = sbr.rel (0) target = $region9
    $region8: #{tpu_custom_call.1} parent=1 // pred_region
      %s23 = ssub.s32 4096, 4096
      %24 = vsyncadd [#allocation6], %s23
      %s25 = sshll.u32 [#allocation5], 4
      %s26 = int_to_ptr.vmem [resolvable:$true] %s25
      %31 = dma.hbm_to_vmem [thread:$0]  %s1, 4096, %s26, [#allocation6], 128, 128, 8
    $region9: #{tpu_custom_call.1} parent=1 // pred_fallthru
      _
    // Predicated region
    $region10: #{tpu_custom_call.1} parent=1 // pred_check
      _
    $region11: #{tpu_custom_call.1} parent=1 // pred_check_branch
      %33 = sbr.rel (0) target = $region13
    $region12: #{tpu_custom_call.1} parent=1 // pred_region
      %34 = dma.done [#allocation3], 256
    $region13: #{tpu_custom_call.1} parent=1 // pred_fallthru
      _
    // Predicated region
    $region14: #{tpu_custom_call.1} parent=1 // pred_check
      _
    $region15: #{tpu_custom_call.1} parent=1 // pred_check_branch
      %36 = sbr.rel (0) target = $region17
    $region16: #{tpu_custom_call.1} parent=1 // pred_region
      %37 = dma.done [#allocation6], 4096
    $region17: #{tpu_custom_call.1} parent=1 // pred_fallthru
      _
    %v38 = vld [vmem:[#allocation2] sm:$0xff]
    %v39 = vld [vmem:[#allocation2 + $0x8] sm:$0xff]
    %v40 = vld [vmem:[#allocation5] sm:$0xff]
    %v41 = vld [vmem:[#allocation5 + $0x8] sm:$0xff]
    %v42 = vld [vmem:[#allocation5 + $0x10] sm:$0xff]
    %v43 = vld [vmem:[#allocation5 + $0x18] sm:$0xff]
    %v44 = vld [vmem:[#allocation5 + $0x20] sm:$0xff]
    %v45 = vld [vmem:[#allocation5 + $0x28] sm:$0xff]
    %v46 = vld [vmem:[#allocation5 + $0x30] sm:$0xff]
    %v47 = vld [vmem:[#allocation5 + $0x38] sm:$0xff]
    %v48 = vld [vmem:[#allocation5 + $0x40] sm:$0xff]
    %v49 = vld [vmem:[#allocation5 + $0x48] sm:$0xff]
    %v50 = vld [vmem:[#allocation5 + $0x50] sm:$0xff]
    %v51 = vld [vmem:[#allocation5 + $0x58] sm:$0xff]
    %v52 = vld [vmem:[#allocation5 + $0x60] sm:$0xff]
    %v53 = vld [vmem:[#allocation5 + $0x68] sm:$0xff]
    %v54 = vld [vmem:[#allocation5 + $0x70] sm:$0xff]
    %v55 = vld [vmem:[#allocation5 + $0x78] sm:$0xff]
    %v56 = vld [vmem:[#allocation5 + $0x80] sm:$0xff]
    %v57 = vld [vmem:[#allocation5 + $0x88] sm:$0xff]
    %v58 = vld [vmem:[#allocation5 + $0x90] sm:$0xff]
    %v59 = vld [vmem:[#allocation5 + $0x98] sm:$0xff]
    %v60 = vld [vmem:[#allocation5 + $0xa0] sm:$0xff]
    %v61 = vld [vmem:[#allocation5 + $0xa8] sm:$0xff]
    %v62 = vld [vmem:[#allocation5 + $0xb0] sm:$0xff]
    %v63 = vld [vmem:[#allocation5 + $0xb8] sm:$0xff]
    %v64 = vld [vmem:[#allocation5 + $0xc0] sm:$0xff]
    %v65 = vld [vmem:[#allocation5 + $0xc8] sm:$0xff]
    %v66 = vld [vmem:[#allocation5 + $0xd0] sm:$0xff]
    %v67 = vld [vmem:[#allocation5 + $0xd8] sm:$0xff]
    %v68 = vld [vmem:[#allocation5 + $0xe0] sm:$0xff]
    %v69 = vld [vmem:[#allocation5 + $0xe8] sm:$0xff]
    %v70 = vld [vmem:[#allocation5 + $0xf0] sm:$0xff]
    %v71 = vld [vmem:[#allocation5 + $0xf8] sm:$0xff]
    %72 = vmatprep.subr.mxu0 0.0
    %73 = vmatpush1.msra.mxu0 %v55
    %74 = vmatprep.subr.mxu0 0.0
    %75 = vmatpush1.msra.mxu0 %v54
    %76 = vmatprep.subr.mxu0 0.0
    %77 = vmatpush1.msra.mxu0 %v53
    %78 = vmatprep.subr.mxu0 0.0
    %79 = vmatpush1.msra.mxu0 %v52
    %80 = vmatprep.subr.mxu0 0.0
    %81 = vmatpush1.msra.mxu0 %v51
    %82 = vmatprep.subr.mxu0 0.0
    %83 = vmatpush1.msra.mxu0 %v50
    %84 = vmatprep.subr.mxu0 0.0
    %85 = vmatpush1.msra.mxu0 %v49
    %86 = vmatprep.subr.mxu0 0.0
    %87 = vmatpush1.msra.mxu0 %v48
    %88 = vmatprep.subr.mxu0 0.0
    %89 = vmatpush1.msra.mxu0 %v47
    %90 = vmatprep.subr.mxu0 0.0
    %91 = vmatpush1.msra.mxu0 %v46
    %92 = vmatprep.subr.mxu0 0.0
    %93 = vmatpush1.msra.mxu0 %v45
    %94 = vmatprep.subr.mxu0 0.0
    %95 = vmatpush1.msra.mxu0 %v44
    %96 = vmatprep.subr.mxu0 0.0
    %97 = vmatpush1.msra.mxu0 %v43
    %98 = vmatprep.subr.mxu0 0.0
    %99 = vmatpush1.msra.mxu0 %v42
    %100 = vmatprep.subr.mxu0 0.0
    %101 = vmatpush1.msra.mxu0 %v41
    %102 = vmatprep.subr.mxu0 0.0
    %103 = vmatpush1.msra.mxu0 %v40
    %104 = vmatprep.subr.mxu0 0.0
    %105 = vmatpush2.msra.mxu0 %v71
    %106 = vmatprep.subr.mxu0 0.0
    %107 = vmatpush2.msra.mxu0 %v70
    %108 = vmatprep.subr.mxu0 0.0
    %109 = vmatpush2.msra.mxu0 %v69
    %110 = vmatprep.subr.mxu0 0.0
    %111 = vmatpush2.msra.mxu0 %v68
    %112 = vmatprep.subr.mxu0 0.0
    %113 = vmatpush2.msra.mxu0 %v67
    %114 = vmatprep.subr.mxu0 0.0
    %115 = vmatpush2.msra.mxu0 %v66
    %116 = vmatprep.subr.mxu0 0.0
    %117 = vmatpush2.msra.mxu0 %v65
    %118 = vmatprep.subr.mxu0 0.0
    %119 = vmatpush2.msra.mxu0 %v64
    %120 = vmatprep.subr.mxu0 0.0
    %121 = vmatpush2.msra.mxu0 %v63
    %122 = vmatprep.subr.mxu0 0.0
    %123 = vmatpush2.msra.mxu0 %v62
    %124 = vmatprep.subr.mxu0 0.0
    %125 = vmatpush2.msra.mxu0 %v61
    %126 = vmatprep.subr.mxu0 0.0
    %127 = vmatpush2.msra.mxu0 %v60
    %128 = vmatprep.subr.mxu0 0.0
    %129 = vmatpush2.msra.mxu0 %v59
    %130 = vmatprep.subr.mxu0 0.0
    %131 = vmatpush2.msra.mxu0 %v58
    %132 = vmatprep.subr.mxu0 0.0
    %133 = vmatpush2.msra.mxu0 %v57
    %134 = vmatprep.subr.mxu0 0.0
    %135 = vmatpush2.msra.mxu0 %v56
    %136 = vmatprep.mubr.f32.mxu0 %v39
    %137 = vmatmul.mubr.f32.gmra.mxu0 %v38
    %v138 = vpop.f32.mrf.mxu0
    %v139 = vadd.f32 0.0, %v138
    %v140 = vpop.f32.mrf.mxu0
    %141 = vdwg.mxu0
    %142 = vst [vmem:[#allocation7] sm:$0xff] %v139
    // Predicated region
    $region18: #{tpu_custom_call.1} parent=1 // pred_check
      _
    $region19: #{tpu_custom_call.1} parent=1 // pred_check_branch
      %144 = sbr.rel (0) target = $region21
    $region20: #{tpu_custom_call.1} parent=1 // pred_region
      %s146 = ssub.s32 128, 128
      %147 = vsyncadd [#allocation4], %s146
      %s149 = sshll.u32 [#allocation7], 4
      %s150 = int_to_ptr.vmem [resolvable:$true] %s149
      %152 = dma.vmem_to_hbm [thread:$0]  %s150, 128, %s2, [#allocation4]
    $region21: #{tpu_custom_call.1} parent=1 // pred_fallthru
      _
    // Predicated region
    $region22: #{tpu_custom_call.1} parent=1 // pred_check
      _
    $region23: #{tpu_custom_call.1} parent=1 // pred_check_branch
      %154 = sbr.rel (0) target = $region25
    $region24: #{tpu_custom_call.1} parent=1 // pred_region
      %155 = dma.done [#allocation4], 128
    $region25: #{tpu_custom_call.1} parent=1 // pred_fallthru
      _
    %156 = vsyncpa [#allocation3], 1
    %157 = vsyncpa [#allocation6], 1
    %158 = vsyncpa [#allocation4], 1

</llo_original>
